<compile_context>
chip_gen: v5e
topology: v5e:2x2
jax: 0.10.0
libtpu: 0.0.40
codegen_flags: <defaults>
</compile_context>

<pallas_src>
import jax
import jax.numpy as jnp
from jax.experimental import pallas as pl
from jax.experimental.pallas import tpu as pltpu


# ---------------------------------------------------------------------------
# Primary (optimal) path: identity, no kernel.
# ---------------------------------------------------------------------------
def noop_module_forward(vision_feat, feat, feat_edge, c_i, relation_mask,
                        att_stack, stack_ptr, mem_in):
    """NoOpModule.forward: pure pass-through (the fastest correct TPU impl)."""
    del vision_feat, feat, feat_edge, c_i, relation_mask  # unused, as in reference
    return att_stack, stack_ptr, mem_in


# ---------------------------------------------------------------------------
# Optional materialized-copy path (only if fresh buffers are really needed).
# One pallas_call, three inputs -> three outputs, full-array VMEM blocks,
# no grid, no aliasing, per-tensor dtypes preserved.
# ---------------------------------------------------------------------------
def _identity3_kernel(att_ref, ptr_ref, mem_ref, att_out, ptr_out, mem_out):
    att_out[...] = att_ref[...]
    ptr_out[...] = ptr_ref[...]
    mem_out[...] = mem_ref[...]


def _materialized_impl(att_stack, stack_ptr, mem_in):
    # TODO(synk): if these tensors ever grow beyond a few MiB, add a 1-D
    # "parallel" grid over the leading axis with ~1-4 MiB blocks instead of
    # full-array blocks (VMEM double-buffering headroom: v5e 16 MiB / v6e
    # 32 MiB / v7x 32 MiB default scoped).
    vmem_spec = pl.BlockSpec(memory_space=pltpu.MemorySpace.VMEM)
    return pl.pallas_call(
        _identity3_kernel,
        out_shape=(
            jax.ShapeDtypeStruct(att_stack.shape, att_stack.dtype),
            jax.ShapeDtypeStruct(stack_ptr.shape, stack_ptr.dtype),
            jax.ShapeDtypeStruct(mem_in.shape, mem_in.dtype),
        ),
        in_specs=[vmem_spec, vmem_spec, vmem_spec],
        out_specs=(vmem_spec, vmem_spec, vmem_spec),
    )(att_stack, stack_ptr, mem_in)


@jax.jit
def noop_module_forward_materialized(vision_feat, feat, feat_edge, c_i,
                                     relation_mask, att_stack, stack_ptr,
                                     mem_in):
    """Same semantics, but returns freshly materialized copies produced by a
    single three-in/three-out Pallas copy (use only when downstream code
    needs new buffers)."""
    del vision_feat, feat, feat_edge, c_i, relation_mask  # unused, as in reference
    return _materialized_impl(att_stack, stack_ptr, mem_in)


if __name__ == "__main__":
    key = jax.random.PRNGKey(0)
    k = jax.random.split(key, 8)

    B, N, S, D, T = 2, 16, 4, 32, 8   # batch, spatial, stack depth, hidden, seq

    # Ignored inputs (present only to mirror the forward signature).
    vision_feat = jax.random.normal(k[0], (B, D, N), dtype=jnp.float32)
    feat = jax.random.normal(k[1], (B, T, D), dtype=jnp.float32)
    feat_edge = jax.random.normal(k[2], (B, T, T, D), dtype=jnp.float32)
    c_i = jax.random.normal(k[3], (B, D), dtype=jnp.float32)
    relation_mask = (jax.random.uniform(k[4], (B, T, T)) > 0.5).astype(jnp.float32)

    # Returned (pass-through) inputs.
    att_stack = jax.random.normal(k[5], (B, N, S), dtype=jnp.float32)
    stack_ptr = jax.nn.one_hot(jnp.zeros((B,), dtype=jnp.int32), S, dtype=jnp.float32)
    mem_in = jax.random.normal(k[7], (B, D), dtype=jnp.float32)

    # Primary path: pure pass-through (no kernel, no copies).
    out_a, out_p, out_m = noop_module_forward(
        vision_feat, feat, feat_edge, c_i, relation_mask,
        att_stack, stack_ptr, mem_in)
    jax.block_until_ready((out_a, out_p, out_m))

    assert out_a.shape == att_stack.shape and out_a.dtype == att_stack.dtype
    assert out_p.shape == stack_ptr.shape and out_p.dtype == stack_ptr.dtype
    assert out_m.shape == mem_in.shape and out_m.dtype == mem_in.dtype
    assert bool(jnp.all(out_a == att_stack))
    assert bool(jnp.all(out_p == stack_ptr))
    assert bool(jnp.all(out_m == mem_in))

    # Optional materialized path: one three-in/three-out Pallas copy.
    mat_a, mat_p, mat_m = noop_module_forward_materialized(
        vision_feat, feat, feat_edge, c_i, relation_mask,
        att_stack, stack_ptr, mem_in)
    jax.block_until_ready((mat_a, mat_p, mat_m))

    assert mat_a.shape == att_stack.shape and mat_a.dtype == att_stack.dtype
    assert mat_p.shape == stack_ptr.shape and mat_p.dtype == stack_ptr.dtype
    assert mat_m.shape == mem_in.shape and mat_m.dtype == mem_in.dtype
    assert bool(jnp.all(mat_a == att_stack))
    assert bool(jnp.all(mat_p == stack_ptr))
    assert bool(jnp.all(mat_m == mem_in))

    print("KERNEL_OK")
</pallas_src>

<mosaic_0001>
module attributes {stable_mosaic.version = 11 : i64} {
  func.func @_identity3_kernel(%arg0: memref<2x16x4xf32, #tpu.memory_space<vmem>>, %arg1: memref<2x4xf32, #tpu.memory_space<vmem>>, %arg2: memref<2x32xf32, #tpu.memory_space<vmem>>, %arg3: memref<2x16x4xf32, #tpu.memory_space<vmem>>, %arg4: memref<2x4xf32, #tpu.memory_space<vmem>>, %arg5: memref<2x32xf32, #tpu.memory_space<vmem>>) attributes {dimension_semantics = [], scalar_prefetch = 0 : i64, scratch_operands = 0 : i64, tpu.core_type = #tpu.core_type<tc>} {
    %c0 = arith.constant 0 : index
    %c0_0 = arith.constant 0 : index
    %c0_1 = arith.constant 0 : index
    %0 = vector.load %arg0[%c0, %c0_0, %c0_1] : memref<2x16x4xf32, #tpu.memory_space<vmem>>, vector<2x16x4xf32>
    %c0_2 = arith.constant 0 : index
    %c0_3 = arith.constant 0 : index
    %c0_4 = arith.constant 0 : index
    %1 = vector.load %arg3[%c0_2, %c0_3, %c0_4] : memref<2x16x4xf32, #tpu.memory_space<vmem>>, vector<2x16x4xf32>
    tpu.vector_store %arg3[%c0_2, %c0_3, %c0_4], %0 {strides = array<i32>} : memref<2x16x4xf32, #tpu.memory_space<vmem>>, vector<2x16x4xf32>,
    %c0_5 = arith.constant 0 : index
    %c0_6 = arith.constant 0 : index
    %2 = vector.load %arg1[%c0_5, %c0_6] : memref<2x4xf32, #tpu.memory_space<vmem>>, vector<2x4xf32>
    %c0_7 = arith.constant 0 : index
    %c0_8 = arith.constant 0 : index
    %3 = vector.load %arg4[%c0_7, %c0_8] : memref<2x4xf32, #tpu.memory_space<vmem>>, vector<2x4xf32>
    tpu.vector_store %arg4[%c0_7, %c0_8], %2 {strides = array<i32>} : memref<2x4xf32, #tpu.memory_space<vmem>>, vector<2x4xf32>,
    %c0_9 = arith.constant 0 : index
    %c0_10 = arith.constant 0 : index
    %4 = vector.load %arg2[%c0_9, %c0_10] : memref<2x32xf32, #tpu.memory_space<vmem>>, vector<2x32xf32>
    %c0_11 = arith.constant 0 : index
    %c0_12 = arith.constant 0 : index
    %5 = vector.load %arg5[%c0_11, %c0_12] : memref<2x32xf32, #tpu.memory_space<vmem>>, vector<2x32xf32>
    tpu.vector_store %arg5[%c0_11, %c0_12], %4 {strides = array<i32>} : memref<2x32xf32, #tpu.memory_space<vmem>>, vector<2x32xf32>,
    return
  }
}

</mosaic_0001>

<llo_original>
// kernel: noop_module_forward_materialized.1
$region0: #{noop_module_forward_materialized.1}
  #allocation0 [shape = 'u32[]', space=smem, size = 0x4, offset = 0x4, fixed_abs, tag = 'smem constant byte address 0x4 - core index']
  #allocation1 [shape = 'u32[72,128]{1,0:T(1,128)}', space=vmem, size = 0x9000, scoped, tag = 'internal scratch']
  %s0 = inlined_call_operand.vmem [shape: f32[2,16,4], index: 0, kind: input, shape index: {}]
  %s1 = inlined_call_operand.vmem [shape: f32[2,4], index: 1, kind: input, shape index: {}]
  %s2 = inlined_call_operand.vmem [shape: f32[2,32], index: 2, kind: input, shape index: {}]
  %s3 = inlined_call_operand.vmem [shape: f32[2,16,4], index: 3, kind: output, shape index: {0}]
  %s4 = inlined_call_operand.hbm [shape: f32[2,4], index: 4, kind: output, shape index: {1}]
  %s5 = inlined_call_operand.hbm [shape: f32[2,32], index: 5, kind: output, shape index: {2}]
  %6 = xla_tuple %s3, %s4, %s5
  %s7 = sld [smem:[#allocation0]]
  $region38: #{noop_module_forward_materialized.1} parent=0
    _
  %s9 = ssub.s32 1, %s7
  %s10 = scalar_select 0, %s9, %s7
  $region1: #{noop_module_forward_materialized.1} parent=0
    #allocation2 [shape = 'u8[1024]{0}', space=vmem, size = 0x400, scoped, tag = 'output window, operand 1, single buffered']
    #allocation3 [shape = 's32[1]{0}', space=sflag, size = 0x4, scoped, tag = 'scoped memory for noop_module_forward_materialized.1']
    #allocation4 [shape = 'u8[1024]{0}', space=vmem, size = 0x400, scoped, tag = 'output window, operand 2, single buffered']
    #allocation5 [shape = 's32[1]{0}', space=sflag, size = 0x4, scoped, tag = 'scoped memory for noop_module_forward_materialized.1']
    %11 = vsyncpa [#allocation3], 0
    %12 = vsyncpa [#allocation5], 0
    // Predicated region
    $region2: #{noop_module_forward_materialized.1} parent=1 // pred_check
      _
    $region3: #{noop_module_forward_materialized.1} parent=1 // pred_check_branch
      %14 = sbr.rel (0) target = $region5
    $region4: #{noop_module_forward_materialized.1} parent=1 // pred_region
      _
    $region5: #{noop_module_forward_materialized.1} parent=1 // pred_fallthru
      _
    // Predicated region
    $region6: #{noop_module_forward_materialized.1} parent=1 // pred_check
      _
    $region7: #{noop_module_forward_materialized.1} parent=1 // pred_check_branch
      %16 = sbr.rel (0) target = $region9
    $region8: #{noop_module_forward_materialized.1} parent=1 // pred_region
      _
    $region9: #{noop_module_forward_materialized.1} parent=1 // pred_fallthru
      _
    // Predicated region
    $region10: #{noop_module_forward_materialized.1} parent=1 // pred_check
      _
    $region11: #{noop_module_forward_materialized.1} parent=1 // pred_check_branch
      %18 = sbr.rel (0) target = $region13
    $region12: #{noop_module_forward_materialized.1} parent=1 // pred_region
      _
    $region13: #{noop_module_forward_materialized.1} parent=1 // pred_fallthru
      _
    %v19 = vld [vmem:[%s0] sm:$0xff]
    %v20 = vld [vmem:[%s0 + $0x8] sm:$0xff]
    %v21 = vld [vmem:[%s0 + $0x10] sm:$0xff]
    %v22 = vld [vmem:[%s0 + $0x18] sm:$0xff]
    %vm23 = vcmask 31744
    %24 = vst.msk [vmem:[%s3] sm:$0xff] %vm23, %v19
    %25 = vst.msk [vmem:[%s3 + $0x8] sm:$0xff] %vm23, %v20
    %26 = vst.msk [vmem:[%s3 + $0x10] sm:$0xff] %vm23, %v21
    %27 = vst.msk [vmem:[%s3 + $0x18] sm:$0xff] %vm23, %v22
    %v28 = vld [vmem:[%s1] sm:$0x3]
    %vm29 = vcmask 25600
    %30 = vst.msk [vmem:[#allocation2] sm:$0x3] %vm29, %v28
    %v31 = vld [vmem:[%s2] sm:$0x3]
    %vm32 = vcmask 254976
    %33 = vst.msk [vmem:[#allocation4] sm:$0x3] %vm32, %v31
    // Predicated region
    $region14: #{noop_module_forward_materialized.1} parent=1 // pred_check
      _
    $region15: #{noop_module_forward_materialized.1} parent=1 // pred_check_branch
      %35 = sbr.rel (0) target = $region17
    $region16: #{noop_module_forward_materialized.1} parent=1 // pred_region
      _
    $region17: #{noop_module_forward_materialized.1} parent=1 // pred_fallthru
      _
    // Predicated region
    $region18: #{noop_module_forward_materialized.1} parent=1 // pred_check
      _
    $region19: #{noop_module_forward_materialized.1} parent=1 // pred_check_branch
      %37 = sbr.rel (0) target = $region21
    $region20: #{noop_module_forward_materialized.1} parent=1 // pred_region
      %39 = vsyncadd [#allocation3], 0
      %s41 = sshll.u32 [#allocation2], 4
      %s42 = int_to_ptr.vmem [resolvable:$true] %s41
      %s43 = sshll.u32 %s4, 4
      %s44 = int_to_ptr.hbm [resolvable:$true] %s43
      %46 = dma.vmem_to_hbm [thread:$0]  %s42, 32, %s44, [#allocation3]
    $region21: #{noop_module_forward_materialized.1} parent=1 // pred_fallthru
      _
    // Predicated region
    $region22: #{noop_module_forward_materialized.1} parent=1 // pred_check
      _
    $region23: #{noop_module_forward_materialized.1} parent=1 // pred_check_branch
      %48 = sbr.rel (0) target = $region25
    $region24: #{noop_module_forward_materialized.1} parent=1 // pred_region
      %50 = vsyncadd [#allocation5], 0
      %s52 = sshll.u32 [#allocation4], 4
      %s53 = int_to_ptr.vmem [resolvable:$true] %s52
      %s54 = sshll.u32 %s5, 4
      %s55 = int_to_ptr.hbm [resolvable:$true] %s54
      %57 = dma.vmem_to_hbm [thread:$0]  %s53, 32, %s55, [#allocation5]
    $region25: #{noop_module_forward_materialized.1} parent=1 // pred_fallthru
      _
    // Predicated region
    $region26: #{noop_module_forward_materialized.1} parent=1 // pred_check
      _
    $region27: #{noop_module_forward_materialized.1} parent=1 // pred_check_branch
      %59 = sbr.rel (0) target = $region29
    $region28: #{noop_module_forward_materialized.1} parent=1 // pred_region
      _
    $region29: #{noop_module_forward_materialized.1} parent=1 // pred_fallthru
      _
    // Predicated region
    $region30: #{noop_module_forward_materialized.1} parent=1 // pred_check
      _
    $region31: #{noop_module_forward_materialized.1} parent=1 // pred_check_branch
      %61 = sbr.rel (0) target = $region33
    $region32: #{noop_module_forward_materialized.1} parent=1 // pred_region
      %63 = dma.done [#allocation3], 32
    $region33: #{noop_module_forward_materialized.1} parent=1 // pred_fallthru
      _
    // Predicated region
    $region34: #{noop_module_forward_materialized.1} parent=1 // pred_check
      _
    $region35: #{noop_module_forward_materialized.1} parent=1 // pred_check_branch
      %65 = sbr.rel (0) target = $region37
    $region36: #{noop_module_forward_materialized.1} parent=1 // pred_region
      %67 = dma.done [#allocation5], 32
    $region37: #{noop_module_forward_materialized.1} parent=1 // pred_fallthru
      _
    %68 = vsyncpa [#allocation3], 1
    %69 = vsyncpa [#allocation5], 1

</llo_original>
